<compile_context>
chip_gen: v5e
topology: v5e:2x2
jax: 0.10.0
libtpu: 0.0.40
codegen_flags: <defaults>
</compile_context>

<pallas_src>
import functools
import math

import jax
import jax.numpy as jnp
from jax.experimental import pallas as pl
from jax.experimental.pallas import tpu as pltpu

GAMMA = 1e-10
LANES = 128        # vreg lane width
SUBLANES = 8       # vreg sublane count
CHUNK_ROWS = 512   # in-kernel sub-chunk; bounds live f32 intermediates to ~256 KiB


def _round_up(x: int, m: int) -> int:
    return ((x + m - 1) // m) * m


def _bpr_partial_kernel(pos_ref, neg_ref, out_ref, *,
                        gamma, chunk_rows, last_block_valid, need_mask):
    """One grid step: (8,128) partial sum of -log(gamma + sigmoid(pos - neg))."""
    tile_rows, lanes = pos_ref.shape
    n_chunks = tile_rows // chunk_rows

    def chunk_partial(c, masked):
        r0 = c * chunk_rows
        if not isinstance(r0, int):
            r0 = pl.multiple_of(r0, chunk_rows)
        # Cast in-kernel (keeps HBM traffic at the caller's dtype width).
        pos = pos_ref[pl.ds(r0, chunk_rows), :].astype(jnp.float32)
        neg = neg_ref[pl.ds(r0, chunk_rows), :].astype(jnp.float32)
        # Exact reference math in f32: sigmoid saturates to {0, 1}; gamma guards log(0).
        sig = 1.0 / (1.0 + jnp.exp(neg - pos))
        val = -jnp.log(gamma + sig)
        if masked:
            # Only the last grid block can contain padded zeros / ragged OOB garbage.
            row = jax.lax.broadcasted_iota(jnp.int32, (chunk_rows, lanes), 0)
            col = jax.lax.broadcasted_iota(jnp.int32, (chunk_rows, lanes), 1)
            idx = (r0 + row) * lanes + col          # element index within this block
            val = jnp.where(idx < last_block_valid, val, 0.0)
        # Collapse the chunk to a single (8,128) vreg with VPU adds only.
        return val.reshape(chunk_rows // SUBLANES, SUBLANES, lanes).sum(axis=0)

    def block_partial(masked):
        if n_chunks == 1:
            return chunk_partial(0, masked)
        return jax.lax.fori_loop(
            0, n_chunks,
            lambda c, acc: acc + chunk_partial(c, masked),
            jnp.zeros((SUBLANES, lanes), jnp.float32))

    if not need_mask:
        out_ref[0] = block_partial(False)
    else:
        i = pl.program_id(0)
        last = pl.num_programs(0) - 1

        @pl.when(i != last)                 # hot path: no per-element mask ops
        def _():
            out_ref[0] = block_partial(False)

        @pl.when(i == last)                 # only the last block masks the tail
        def _():
            out_ref[0] = block_partial(True)


def bpr_loss(pos_score: jax.Array, neg_score: jax.Array, *,
             gamma: float = GAMMA, max_tile_rows: int = 8192) -> jax.Array:
    """Scalar float32 loss matching BPRLoss.forward for any input shape / float dtype."""
    assert pos_score.shape == neg_score.shape
    assert max_tile_rows % SUBLANES == 0

    n_valid = int(math.prod(pos_score.shape))
    assert 0 < n_valid < 2 ** 31  # in-kernel index math is int32

    pos_flat = pos_score.reshape(-1)
    neg_flat = neg_score.reshape(-1)

    if n_valid % LANES == 0:
        # Fast path: free bitcast-reshape, no wrapper-side pad copy at all.
        n_rows = n_valid // LANES
    else:
        # Slow path: pad only to the next multiple of 1024 elements (8 rows).
        padded = _round_up(n_valid, LANES * SUBLANES)
        pos_flat = jnp.pad(pos_flat, (0, padded - n_valid))
        neg_flat = jnp.pad(neg_flat, (0, padded - n_valid))
        n_rows = padded // LANES
    pos2d = pos_flat.reshape(n_rows, LANES)
    neg2d = neg_flat.reshape(n_rows, LANES)

    # Tile size: big blocks to amortize per-step overhead; a multiple of CHUNK_ROWS when
    # chunked so the in-kernel loop covers the block exactly (ragged last grid block ok).
    tile_rows = min(max_tile_rows, _round_up(n_rows, SUBLANES))
    if tile_rows > CHUNK_ROWS:
        tile_rows = _round_up(tile_rows, CHUNK_ROWS)
    chunk_rows = min(tile_rows, CHUNK_ROWS)

    grid_len = pl.cdiv(n_rows, tile_rows)
    last_block_valid = n_valid - (grid_len - 1) * tile_rows * LANES
    need_mask = last_block_valid != tile_rows * LANES

    kernel = functools.partial(
        _bpr_partial_kernel,
        gamma=float(gamma),
        chunk_rows=int(chunk_rows),
        last_block_valid=int(last_block_valid),
        need_mask=bool(need_mask),
    )

    partials = pl.pallas_call(
        kernel,
        out_shape=jax.ShapeDtypeStruct((grid_len, SUBLANES, LANES), jnp.float32),
        grid_spec=pltpu.PrefetchScalarGridSpec(
            num_scalar_prefetch=0,
            grid=(grid_len,),
            in_specs=[
                pl.BlockSpec((tile_rows, LANES), lambda i: (i, 0)),
                pl.BlockSpec((tile_rows, LANES), lambda i: (i, 0)),
            ],
            out_specs=pl.BlockSpec((1, SUBLANES, LANES), lambda i: (i, 0, 0)),
        ),
        compiler_params=pltpu.CompilerParams(
            # Independent partial per step -> fully parallel grid (megacore-friendly).
            # If xprof shows a single TC doing all steps on v7x, switch to
            # (pltpu.CORE_PARALLEL,).
            dimension_semantics=("parallel",),
            # 2 inputs x 2 pipeline buffers x <=4 MiB/block + ~1-2 MiB of chunked
            # intermediates fits easily; 48 MiB is safe on v5e/v6e (128 MiB) and
            # v7x (64 MiB physical).
            vmem_limit_bytes=48 * 1024 * 1024,
        ),
    )(pos2d, neg2d)

    # Single scalar collapse + mean, done once outside the hot loop.
    return jnp.sum(partials) / jnp.float32(n_valid)


def bpr_loss_ref(pos_score, neg_score, gamma: float = GAMMA):
    return -jnp.log(gamma + jax.nn.sigmoid(pos_score - neg_score)).mean()


if __name__ == "__main__":
    key = jax.random.PRNGKey(0)
    kp, kn, kp1, kn1, kp2, kn2, kp3, kn3, kp4, kn4 = jax.random.split(key, 10)

    # 2-D scores (typical pairwise-sampled BPR batch), lane-aligned, single block.
    pos = jax.random.normal(kp, (16, 128), dtype=jnp.float32)
    neg = jax.random.normal(kn, (16, 128), dtype=jnp.float32)
    loss = jax.block_until_ready(bpr_loss(pos, neg))
    ref = jax.block_until_ready(bpr_loss_ref(pos, neg))
    assert jnp.allclose(loss, ref, rtol=1e-5, atol=1e-6), (loss, ref)

    # 1-D ragged length (exercises flatten + small pad + tail mask).
    pos1 = jax.random.normal(kp1, (1000,), dtype=jnp.float32)
    neg1 = jax.random.normal(kn1, (1000,), dtype=jnp.float32)
    loss1 = jax.block_until_ready(bpr_loss(pos1, neg1))
    ref1 = jax.block_until_ready(bpr_loss_ref(pos1, neg1))
    assert jnp.allclose(loss1, ref1, rtol=1e-5, atol=1e-6), (loss1, ref1)

    # Multi-block grid, lane-aligned, no mask anywhere (forces small tiles).
    pos2 = jax.random.normal(kp2, (48, 256), dtype=jnp.float32)
    neg2 = jax.random.normal(kn2, (48, 256), dtype=jnp.float32)
    loss2 = jax.block_until_ready(bpr_loss(pos2, neg2, max_tile_rows=16))
    ref2 = jax.block_until_ready(bpr_loss_ref(pos2, neg2))
    assert jnp.allclose(loss2, ref2, rtol=1e-5, atol=1e-6), (loss2, ref2)

    # Multi-block grid with a ragged, masked last block (forces small tiles).
    pos3 = jax.random.normal(kp3, (50, 100), dtype=jnp.float32)
    neg3 = jax.random.normal(kn3, (50, 100), dtype=jnp.float32)
    loss3 = jax.block_until_ready(bpr_loss(pos3, neg3, max_tile_rows=16))
    ref3 = jax.block_until_ready(bpr_loss_ref(pos3, neg3))
    assert jnp.allclose(loss3, ref3, rtol=1e-5, atol=1e-6), (loss3, ref3)

    # Chunked in-kernel accumulation (tile > 512 rows) + ragged block + bf16 inputs.
    pos4 = jax.random.normal(kp4, (520, 128), dtype=jnp.bfloat16)
    neg4 = jax.random.normal(kn4, (520, 128), dtype=jnp.bfloat16)
    loss4 = jax.block_until_ready(bpr_loss(pos4, neg4))
    ref4 = jax.block_until_ready(
        bpr_loss_ref(pos4.astype(jnp.float32), neg4.astype(jnp.float32)))
    assert jnp.allclose(loss4, ref4, rtol=1e-5, atol=1e-5), (loss4, ref4)

    print("KERNEL_OK")
</pallas_src>

<mosaic_0001>
module attributes {stable_mosaic.version = 11 : i64} {
  func.func @_bpr_partial_kernel(%arg0: i32, %arg1: memref<16x128xf32, #tpu.memory_space<vmem>>, %arg2: memref<16x128xf32, #tpu.memory_space<vmem>>, %arg3: memref<1x8x128xf32, #tpu.memory_space<vmem>>) attributes {dimension_semantics = [#tpu.dimension_semantics<parallel>], iteration_bounds = array<i64: 1>, scalar_prefetch = 0 : i64, scratch_operands = 0 : i64, tpu.core_type = #tpu.core_type<tc>, window_params = [{transform_indices = @transform_0, window_bounds = array<i64: 16, 128>}, {transform_indices = @transform_1, window_bounds = array<i64: 16, 128>}, {transform_indices = @transform_2, window_bounds = array<i64: 1, 8, 128>}]} {
    %c0 = arith.constant 0 : index
    %c0_0 = arith.constant 0 : index
    %0 = vector.load %arg1[%c0, %c0_0] : memref<16x128xf32, #tpu.memory_space<vmem>>, vector<16x128xf32>
    %c0_1 = arith.constant 0 : index
    %c0_2 = arith.constant 0 : index
    %1 = vector.load %arg2[%c0_1, %c0_2] : memref<16x128xf32, #tpu.memory_space<vmem>>, vector<16x128xf32>
    %2 = arith.subf %1, %0 : vector<16x128xf32>
    %3 = math.exp %2 : vector<16x128xf32>
    %cst = arith.constant 1.000000e+00 : f32
    %4 = vector.broadcast %cst : f32 to vector<16x128xf32>
    %5 = arith.addf %4, %3 : vector<16x128xf32>
    %cst_3 = arith.constant 1.000000e+00 : f32
    %6 = vector.broadcast %cst_3 : f32 to vector<16x128xf32>
    %7 = arith.divf %6, %5 : vector<16x128xf32>
    %cst_4 = arith.constant 1.000000e-10 : f32
    %8 = vector.broadcast %cst_4 : f32 to vector<16x128xf32>
    %9 = arith.addf %8, %7 : vector<16x128xf32>
    %10 = math.log %9 : vector<16x128xf32>
    %cst_5 = arith.constant 0.000000e+00 : f32
    %11 = vector.broadcast %cst_5 : f32 to vector<16x128xf32>
    %12 = arith.subf %11, %10 : vector<16x128xf32>
    %13 = vector.shape_cast %12 : vector<16x128xf32> to vector<2x8x128xf32>
    %cst_6 = arith.constant dense<0.000000e+00> : vector<8x128xf32>
    %14 = vector.multi_reduction <add>, %13, %cst_6 [0] : vector<2x8x128xf32> to vector<8x128xf32>
    %c0_7 = arith.constant 0 : index
    %c0_8 = arith.constant 0 : index
    %c0_9 = arith.constant 0 : index
    %15 = vector.load %arg3[%c0_7, %c0_8, %c0_9] : memref<1x8x128xf32, #tpu.memory_space<vmem>>, vector<1x8x128xf32>
    %16 = vector.shape_cast %15 : vector<1x8x128xf32> to vector<8x128xf32>
    %17 = vector.shape_cast %14 : vector<8x128xf32> to vector<1x8x128xf32>
    tpu.vector_store %arg3[%c0_7, %c0_8, %c0_9], %17 {strides = array<i32>} : memref<1x8x128xf32, #tpu.memory_space<vmem>>, vector<1x8x128xf32>,
    return
  }
  func.func @transform_0(%arg0: i32) -> (i32, i32) {
    %c0_i32 = arith.constant 0 : i32
    %c0_i32_0 = arith.constant 0 : i32
    return %arg0, %c0_i32 : i32, i32
  }
  func.func @transform_1(%arg0: i32) -> (i32, i32) {
    %c0_i32 = arith.constant 0 : i32
    %c0_i32_0 = arith.constant 0 : i32
    return %arg0, %c0_i32 : i32, i32
  }
  func.func @transform_2(%arg0: i32) -> (i32, i32, i32) {
    %c0_i32 = arith.constant 0 : i32
    %c0_i32_0 = arith.constant 0 : i32
    %c0_i32_1 = arith.constant 0 : i32
    return %arg0, %c0_i32, %c0_i32_0 : i32, i32, i32
  }
}

</mosaic_0001>

<llo_original>
// kernel: tpu_custom_call.1
$region0: #{tpu_custom_call.1}
  #allocation0 [shape = 'u32[]', space=smem, size = 0x4, offset = 0x4, fixed_abs, tag = 'smem constant byte address 0x4 - core index']
  #allocation1 [shape = 'u32[72,128]{1,0:T(1,128)}', space=vmem, size = 0x9000, scoped, tag = 'internal scratch']
  %s0 = inlined_call_operand.hbm [shape: f32[16,128], index: 0, kind: input, shape index: {}]
  %s1 = inlined_call_operand.hbm [shape: f32[16,128], index: 1, kind: input, shape index: {}]
  %s2 = inlined_call_operand.hbm [shape: f32[1,8,128], index: 2, kind: output, shape index: {}]
  %s3 = sld [smem:[#allocation0]]
  $region26: #{tpu_custom_call.1} parent=0
    _
  %s5 = ssub.s32 1, %s3
  %s6 = scalar_select 0, %s5, %s3
  $region1: #{tpu_custom_call.1} parent=0
    #allocation2 [shape = 'u8[8192]{0}', space=vmem, size = 0x2000, scoped, tag = 'input window, operand 0, single buffered']
    #allocation3 [shape = 's32[1]{0}', space=sflag, size = 0x4, scoped, tag = 'scoped memory for tpu_custom_call.1']
    #allocation4 [shape = 's32[1]{0}', space=sflag, size = 0x4, scoped, tag = 'scoped memory for tpu_custom_call.1']
    #allocation5 [shape = 'u8[8192]{0}', space=vmem, size = 0x2000, scoped, tag = 'input window, operand 1, single buffered']
    #allocation6 [shape = 's32[1]{0}', space=sflag, size = 0x4, scoped, tag = 'scoped memory for tpu_custom_call.1']
    #allocation7 [shape = 'u8[4096]{0}', space=vmem, size = 0x1000, scoped, tag = 'output window, operand 0, single buffered']
    %7 = vsyncpa [#allocation3], 0
    %8 = vsyncpa [#allocation6], 0
    %9 = vsyncpa [#allocation4], 0
    // Predicated region
    $region2: #{tpu_custom_call.1} parent=1 // pred_check
      _
    $region3: #{tpu_custom_call.1} parent=1 // pred_check_branch
      %11 = sbr.rel (0) target = $region5
    $region4: #{tpu_custom_call.1} parent=1 // pred_region
      %13 = vsyncadd [#allocation3], 0
      %s14 = sshll.u32 %s0, 4
      %s15 = int_to_ptr.hbm [resolvable:$true] %s14
      %s16 = sshll.u32 [#allocation2], 4
      %s17 = int_to_ptr.vmem [resolvable:$true] %s16
      %22 = dma.hbm_to_vmem [thread:$0]  %s15, 256, %s17, [#allocation3], 128, 128, 8
    $region5: #{tpu_custom_call.1} parent=1 // pred_fallthru
      _
    // Predicated region
    $region6: #{tpu_custom_call.1} parent=1 // pred_check
      _
    $region7: #{tpu_custom_call.1} parent=1 // pred_check_branch
      %24 = sbr.rel (0) target = $region9
    $region8: #{tpu_custom_call.1} parent=1 // pred_region
      %26 = vsyncadd [#allocation6], 0
      %s27 = sshll.u32 %s1, 4
      %s28 = int_to_ptr.hbm [resolvable:$true] %s27
      %s29 = sshll.u32 [#allocation5], 4
      %s30 = int_to_ptr.vmem [resolvable:$true] %s29
      %35 = dma.hbm_to_vmem [thread:$0]  %s28, 256, %s30, [#allocation6], 128, 128, 8
    $region9: #{tpu_custom_call.1} parent=1 // pred_fallthru
      _
    // Predicated region
    $region10: #{tpu_custom_call.1} parent=1 // pred_check
      _
    $region11: #{tpu_custom_call.1} parent=1 // pred_check_branch
      %37 = sbr.rel (0) target = $region13
    $region12: #{tpu_custom_call.1} parent=1 // pred_region
      %39 = dma.done [#allocation3], 256
    $region13: #{tpu_custom_call.1} parent=1 // pred_fallthru
      _
    // Predicated region
    $region14: #{tpu_custom_call.1} parent=1 // pred_check
      _
    $region15: #{tpu_custom_call.1} parent=1 // pred_check_branch
      %41 = sbr.rel (0) target = $region17
    $region16: #{tpu_custom_call.1} parent=1 // pred_region
      %43 = dma.done [#allocation6], 256
    $region17: #{tpu_custom_call.1} parent=1 // pred_fallthru
      _
    %v44 = vld [vmem:[#allocation2] sm:$0xff]
    %v45 = vld [vmem:[#allocation2 + $0x8] sm:$0xff]
    %v46 = vld [vmem:[#allocation5] sm:$0xff]
    %v47 = vld [vmem:[#allocation5 + $0x8] sm:$0xff]
    %v48 = vsub.f32 %v46, %v44
    %v49 = vsub.f32 %v47, %v45
    %v50 = vmul.f32 %v48, 1.442695
    %v51 = vpow.pop %v50
    %v52 = vmul.f32 %v49, 1.442695
    %v53 = vpow.pop %v52
    %v54 = vadd.f32 %v51, 1.0
    %v55 = vadd.f32 %v53, 1.0
    %v56 = vrcp.pop %v54
    %v57 = vmul.f32 %v54, %v56
    %v58 = vsub.f32 1.0, %v57
    %v59 = vmul.f32 %v56, %v58
    %v60 = vadd.f32 %v56, %v59
    %vm61 = vweird.f32 %v54
    %vm62 = vweird.f32 %v56
    %vm63 = vmor %vm61, %vm62
    %v64 = vsel %vm63, %v56, %v60
    %v65 = vand.u32 2147483647, %v54
    %vm66 = vcmp.eq.f32.partialorder %v65, 8.507059e+37
    %v67 = vand.u32 %v54, 2147483648
    %v68 = vor.u32 1.1754944e-38, %v67
    %v69 = vsel %vm66, %v68, %v64
    %v70 = vmul.f32 1.0, %v69
    %v71 = vrcp.pop %v55
    %v72 = vmul.f32 %v55, %v71
    %v73 = vsub.f32 1.0, %v72
    %v74 = vmul.f32 %v71, %v73
    %v75 = vadd.f32 %v71, %v74
    %vm76 = vweird.f32 %v55
    %vm77 = vweird.f32 %v71
    %vm78 = vmor %vm76, %vm77
    %v79 = vsel %vm78, %v71, %v75
    %v80 = vand.u32 2147483647, %v55
    %vm81 = vcmp.eq.f32.partialorder %v80, 8.507059e+37
    %v82 = vand.u32 %v55, 2147483648
    %v83 = vor.u32 1.1754944e-38, %v82
    %v84 = vsel %vm81, %v83, %v79
    %v85 = vmul.f32 1.0, %v84
    %v86 = vadd.f32 %v70, 1e-10
    %v87 = vadd.f32 %v85, 1e-10
    %v88 = vlog2.pop %v86
    %v89 = vmul.f32 %v88, 0.6931472
    %v90 = vlog2.pop %v87
    %v91 = vmul.f32 %v90, 0.6931472
    %v92 = vsub.f32 0.0, %v89
    %v93 = vsub.f32 0.0, %v91
    %v94 = vadd.f32 %v92, %v93
    %95 = vst [vmem:[#allocation7] sm:$0xff] %v94
    // Predicated region
    $region18: #{tpu_custom_call.1} parent=1 // pred_check
      _
    $region19: #{tpu_custom_call.1} parent=1 // pred_check_branch
      %97 = sbr.rel (0) target = $region21
    $region20: #{tpu_custom_call.1} parent=1 // pred_region
      %99 = vsyncadd [#allocation4], 0
      %s101 = sshll.u32 [#allocation7], 4
      %s102 = int_to_ptr.vmem [resolvable:$true] %s101
      %s103 = sshll.u32 %s2, 4
      %s104 = int_to_ptr.hbm [resolvable:$true] %s103
      %106 = dma.vmem_to_hbm [thread:$0]  %s102, 128, %s104, [#allocation4]
    $region21: #{tpu_custom_call.1} parent=1 // pred_fallthru
      _
    // Predicated region
    $region22: #{tpu_custom_call.1} parent=1 // pred_check
      _
    $region23: #{tpu_custom_call.1} parent=1 // pred_check_branch
      %108 = sbr.rel (0) target = $region25
    $region24: #{tpu_custom_call.1} parent=1 // pred_region
      %110 = dma.done [#allocation4], 128
    $region25: #{tpu_custom_call.1} parent=1 // pred_fallthru
      _
    %111 = vsyncpa [#allocation3], 1
    %112 = vsyncpa [#allocation6], 1
    %113 = vsyncpa [#allocation4], 1

</llo_original>
